<compile_context>
chip_gen: v5e
topology: v5e:2x2
jax: 0.10.0
libtpu: 0.0.40
codegen_flags: <defaults>
</compile_context>

<pallas_src>
import functools

import numpy as np
import jax
import jax.numpy as jnp
from jax.experimental import pallas as pl
from jax.experimental.pallas import tpu as pltpu

_LANE = 128
_PAIR = 2 * _LANE            # 256 lanes per row: interleaved x,y of 128 points
_CHUNK = 16                  # sublane rows per inner-loop step (4 vregs/array)
_MAX_TILE_ROWS = 1024        # 1024 x 256 f32 = 1 MiB per input per buffer
_MIN_POINTS_FOR_PALLAS = 2048


def _cdiv(a, b):
    return -(-a // b)


def _round_up(x, m):
    return _cdiv(x, m) * m


def _make_reconst_kernel(tile_rows):
    n_chunks = tile_rows // _CHUNK

    def kernel(gt_ref, out_ref, loss_ref, cnt_ref):
        # ---- hoisted chunk-shaped constants (computed once per grid step) ----
        lane = jax.lax.broadcasted_iota(jnp.int32, (_CHUNK, _PAIR), 1)
        # We want "bring lane j+1 to lane j" (np.roll with positive shift 255).
        # Probe the rotate direction once with an iota so the pairing is
        # correct regardless of the rotate convention.
        rolled_lane = pltpu.roll(lane, shift=_PAIR - 1, axis=1)
        fwd = rolled_lane == ((lane + 1) & (_PAIR - 1))   # all-True or all-False
        is_even = (lane & 1) == 0
        # Lanes where (own d2 + rolled d2) is the same-point dx^2 + dy^2.
        pair_lane = is_even == fwd

        def body(c, carry):
            loss_acc, cnt_acc = carry
            r = pl.multiple_of(c * _CHUNK, _CHUNK)
            g = gt_ref[pl.ds(r, _CHUNK), :].astype(jnp.float32)
            o = out_ref[pl.ds(r, _CHUNK), :].astype(jnp.float32)
            d = g - o
            d2 = d * d
            pair = d2 + pltpu.roll(d2, shift=_PAIR - 1, axis=1)  # dx^2+dy^2 on pair_lane
            # gt_x of the point owning this pair lane: g itself when the roll is
            # "forward", otherwise the rolled g.
            gx = jnp.where(fwd, g, pltpu.roll(g, shift=_PAIR - 1, axis=1))
            valid = pair_lane & (gx != jnp.float32(0.0))    # torch.nonzero(gt[:,0])
            dist = jnp.sqrt(pair)                           # EUP
            loss_acc = loss_acc + jnp.where(valid, dist, jnp.float32(0.0))
            cnt_acc = cnt_acc + jnp.where(valid, jnp.float32(1.0), jnp.float32(0.0))
            return loss_acc, cnt_acc

        zeros = jnp.zeros((_CHUNK, _PAIR), jnp.float32)
        loss_acc, cnt_acc = jax.lax.fori_loop(
            0, n_chunks, body, (zeros, zeros), unroll=min(8, n_chunks))
        loss_ref[...] = loss_acc
        cnt_ref[...] = cnt_acc

    return kernel


def _pad_to_blocks(a, rows_padded):
    """Flatten, zero-pad (zero gt_x == invalid) and reshape to (rows, 256)."""
    flat = jnp.reshape(a, (-1,))
    pad = rows_padded * _PAIR - flat.shape[0]
    if pad:
        flat = jnp.pad(flat, (0, pad))
    return jnp.reshape(flat, (rows_padded, _PAIR))


def _reconst_loss_jnp(reconstruction_out, reconstruction_gt):
    gt2 = jnp.reshape(reconstruction_gt, (-1, 2)).astype(jnp.float32)
    out2 = jnp.reshape(reconstruction_out, (-1, 2)).astype(jnp.float32)
    valid = gt2[:, 0] != 0.0
    d = gt2 - out2
    dist = jnp.sqrt(jnp.sum(d * d, axis=1))
    return {
        "reconst_loss": jnp.sum(jnp.where(valid, dist, 0.0)),
        "reconst_loss_cnt": jnp.sum(valid.astype(jnp.int32)),
    }


def reconst_loss_forward(reconstruction_out, reconstruction_gt, *,
                         min_points_for_pallas=_MIN_POINTS_FOR_PALLAS):
    """Pallas port of ReconstLoss.forward. Returns device scalars in a dict."""
    n_elems = int(np.prod(reconstruction_gt.shape))
    n_points = n_elems // 2
    if n_points < min_points_for_pallas:
        # Launch + padding overhead dominates at tiny sizes -> plain jnp.
        return _reconst_loss_jnp(reconstruction_out, reconstruction_gt)

    rows_needed = max(1, _cdiv(n_elems, _PAIR))
    # Biggest tile within budget, but >= 2 blocks whenever possible so both
    # v7x TensorCores get work via the "parallel" grid axis.
    tile_rows = min(_MAX_TILE_ROWS, _round_up(_cdiv(rows_needed, 2), _CHUNK))
    rows_padded = _round_up(rows_needed, tile_rows)
    num_blocks = rows_padded // tile_rows

    gt_blk = _pad_to_blocks(reconstruction_gt, rows_padded)     # dtype preserved
    out_blk = _pad_to_blocks(reconstruction_out, rows_padded)   # (bf16 stays bf16)

    itemsz = gt_blk.dtype.itemsize + out_blk.dtype.itemsize
    in_bytes = rows_padded * _PAIR * itemsz
    out_bytes = 2 * num_blocks * _CHUNK * _PAIR * 4
    tile_in_bytes = tile_rows * _PAIR * itemsz
    vmem_limit = int(min(32 * 1024 * 1024,
                         max(4 * 1024 * 1024, 3 * 2 * tile_in_bytes)))

    in_spec = pl.BlockSpec((tile_rows, _PAIR), lambda i: (i, 0))
    out_spec = pl.BlockSpec((_CHUNK, _PAIR), lambda i: (i, 0))
    part_shape = jax.ShapeDtypeStruct((num_blocks * _CHUNK, _PAIR), jnp.float32)

    loss_part, cnt_part = pl.pallas_call(
        _make_reconst_kernel(tile_rows),
        out_shape=(part_shape, part_shape),
        grid=(num_blocks,),
        in_specs=[in_spec, in_spec],
        out_specs=(out_spec, out_spec),
        compiler_params=pltpu.CompilerParams(
            dimension_semantics=("parallel",),
            vmem_limit_bytes=vmem_limit,
            allow_input_fusion=[True, True],
        ),
        cost_estimate=pl.CostEstimate(
            flops=10 * rows_padded * _PAIR,
            transcendentals=rows_padded * _PAIR,
            bytes_accessed=in_bytes + out_bytes,
        ),
    )(gt_blk, out_blk)

    # Count partials are small integers in f32 -> exact after int32 cast.
    return {
        "reconst_loss": jnp.sum(loss_part),
        "reconst_loss_cnt": jnp.sum(cnt_part.astype(jnp.int32)),
    }


def reference_reconst_loss(reconstruction_out, reconstruction_gt):
    """Pure-numpy mirror of the PyTorch forward (float64 accumulation)."""
    gt2 = np.asarray(reconstruction_gt, np.float64).reshape(-1, 2)
    out2 = np.asarray(reconstruction_out, np.float64).reshape(-1, 2)
    idx = np.nonzero(gt2[:, 0])[0]
    err = (gt2 - out2)[idx]
    return float(np.sqrt((err ** 2).sum(axis=1)).sum()), int(idx.size)


def _make_case(key, n_traj, n_steps, drop_prob):
    k_gt, k_out, k_mask = jax.random.split(key, 3)
    gt = jax.random.normal(k_gt, (n_traj, n_steps, 2), dtype=jnp.float32)
    keep = jax.random.uniform(k_mask, (n_traj, n_steps, 1)) > drop_prob
    gt = gt * keep.astype(jnp.float32)          # zeroed rows -> ignored
    out = jax.random.normal(k_out, (n_traj, n_steps, 2), dtype=jnp.float32)
    return out, gt


def _check(res, out, gt, tag):
    loss = float(jax.block_until_ready(res["reconst_loss"]))
    cnt = int(res["reconst_loss_cnt"])
    ref_loss, ref_cnt = reference_reconst_loss(np.asarray(out), np.asarray(gt))
    assert cnt == ref_cnt, (tag, cnt, ref_cnt)
    assert abs(loss - ref_loss) <= 1e-3 * max(1.0, abs(ref_loss)), (tag, loss, ref_loss)


if __name__ == "__main__":
    key = jax.random.PRNGKey(0)
    k_small, k_large = jax.random.split(key)

    # Module-native small shape: 6 trajectories x 30 timesteps x (x, y).
    out_s, gt_s = _make_case(k_small, 6, 30, 0.3)
    pallas_fwd = jax.jit(functools.partial(reconst_loss_forward,
                                           min_points_for_pallas=1))
    _check(pallas_fwd(out_s, gt_s), out_s, gt_s, "small-pallas")
    _check(jax.jit(reconst_loss_forward)(out_s, gt_s), out_s, gt_s, "small-jnp")

    # Larger case: multi-block "parallel" grid (2 blocks) + multi-chunk loop.
    out_l, gt_l = _make_case(k_large, 64, 600, 0.25)
    _check(jax.jit(reconst_loss_forward)(out_l, gt_l), out_l, gt_l, "large-pallas")

    print("KERNEL_OK")
</pallas_src>

<mosaic_0001>
module attributes {stable_mosaic.version = 11 : i64} {
  func.func @kernel(%arg0: i32, %arg1: memref<16x256xf32, #tpu.memory_space<vmem>>, %arg2: memref<16x256xf32, #tpu.memory_space<vmem>>, %arg3: memref<16x256xf32, #tpu.memory_space<vmem>>, %arg4: memref<16x256xf32, #tpu.memory_space<vmem>>) attributes {dimension_semantics = [#tpu.dimension_semantics<parallel>], iteration_bounds = array<i64: 1>, scalar_prefetch = 0 : i64, scratch_operands = 0 : i64, tpu.core_type = #tpu.core_type<tc>, window_params = [{transform_indices = @transform_0, window_bounds = array<i64: 16, 256>}, {transform_indices = @transform_1, window_bounds = array<i64: 16, 256>}, {transform_indices = @transform_2, window_bounds = array<i64: 16, 256>}, {transform_indices = @transform_3, window_bounds = array<i64: 16, 256>}]} {
    %0 = tpu.iota {dimensions = array<i32: 1>} : vector<16x256xi32>
    %c255_i32 = arith.constant 255 : i32
    %1 = tpu.dynamic_rotate %0 by %c255_i32 dim 1 : vector<16x256xi32>, i32 -> vector<16x256xi32>
    %c1_i32 = arith.constant 1 : i32
    %2 = vector.broadcast %c1_i32 : i32 to vector<16x256xi32>
    %3 = arith.addi %0, %2 : vector<16x256xi32>
    %c255_i32_0 = arith.constant 255 : i32
    %4 = vector.broadcast %c255_i32_0 : i32 to vector<16x256xi32>
    %5 = arith.andi %3, %4 : vector<16x256xi32>
    %6 = arith.cmpi eq, %1, %5 : vector<16x256xi32>
    %c1_i32_1 = arith.constant 1 : i32
    %7 = vector.broadcast %c1_i32_1 : i32 to vector<16x256xi32>
    %8 = arith.andi %0, %7 : vector<16x256xi32>
    %c0_i32 = arith.constant 0 : i32
    %9 = vector.broadcast %c0_i32 : i32 to vector<16x256xi32>
    %10 = arith.cmpi eq, %8, %9 : vector<16x256xi32>
    %11 = arith.xori %10, %6 : vector<16x256xi1>
    %cst = arith.constant dense<true> : vector<16x256xi1>
    %12 = arith.xori %11, %cst : vector<16x256xi1>
    %cst_2 = arith.constant 0.000000e+00 : f32
    %13 = vector.broadcast %cst_2 : f32 to vector<16x256xf32>
    %c0_i32_3 = arith.constant 0 : i32
    %c16_i32 = arith.constant 16 : i32
    %14 = arith.muli %c0_i32_3, %c16_i32 : i32
    %15 = tpu.assume_multiple %14, 16 : i32
    %16 = arith.index_cast %15 : i32 to index
    %c0 = arith.constant 0 : index
    %17 = vector.load %arg1[%16, %c0] : memref<16x256xf32, #tpu.memory_space<vmem>>, vector<16x256xf32>
    %18 = arith.index_cast %15 : i32 to index
    %c0_4 = arith.constant 0 : index
    %19 = vector.load %arg2[%18, %c0_4] : memref<16x256xf32, #tpu.memory_space<vmem>>, vector<16x256xf32>
    %20 = arith.subf %17, %19 : vector<16x256xf32>
    %21 = arith.mulf %20, %20 : vector<16x256xf32>
    %c255_i32_5 = arith.constant 255 : i32
    %22 = tpu.dynamic_rotate %21 by %c255_i32_5 dim 1 : vector<16x256xf32>, i32 -> vector<16x256xf32>
    %23 = arith.addf %21, %22 : vector<16x256xf32>
    %c255_i32_6 = arith.constant 255 : i32
    %24 = tpu.dynamic_rotate %17 by %c255_i32_6 dim 1 : vector<16x256xf32>, i32 -> vector<16x256xf32>
    %25 = arith.select %6, %17, %24 : vector<16x256xi1>, vector<16x256xf32>
    %cst_7 = arith.constant 0.000000e+00 : f32
    %26 = vector.broadcast %cst_7 : f32 to vector<16x256xf32>
    %27 = arith.cmpf one, %25, %26 : vector<16x256xf32>
    %28 = arith.andi %12, %27 : vector<16x256xi1>
    %29 = math.sqrt %23 : vector<16x256xf32>
    %cst_8 = arith.constant 0.000000e+00 : f32
    %30 = vector.broadcast %cst_8 : f32 to vector<16x256xf32>
    %31 = arith.select %28, %29, %30 : vector<16x256xi1>, vector<16x256xf32>
    %32 = arith.addf %13, %31 : vector<16x256xf32>
    %cst_9 = arith.constant 1.000000e+00 : f32
    %cst_10 = arith.constant 0.000000e+00 : f32
    %33 = vector.broadcast %cst_9 : f32 to vector<16x256xf32>
    %34 = vector.broadcast %cst_10 : f32 to vector<16x256xf32>
    %35 = arith.select %28, %33, %34 : vector<16x256xi1>, vector<16x256xf32>
    %36 = arith.addf %13, %35 : vector<16x256xf32>
    %c1_i32_11 = arith.constant 1 : i32
    %c0_12 = arith.constant 0 : index
    %c0_13 = arith.constant 0 : index
    %37 = vector.load %arg3[%c0_12, %c0_13] : memref<16x256xf32, #tpu.memory_space<vmem>>, vector<16x256xf32>
    tpu.vector_store %arg3[%c0_12, %c0_13], %32 {strides = array<i32>} : memref<16x256xf32, #tpu.memory_space<vmem>>, vector<16x256xf32>,
    %c0_14 = arith.constant 0 : index
    %c0_15 = arith.constant 0 : index
    %38 = vector.load %arg4[%c0_14, %c0_15] : memref<16x256xf32, #tpu.memory_space<vmem>>, vector<16x256xf32>
    tpu.vector_store %arg4[%c0_14, %c0_15], %36 {strides = array<i32>} : memref<16x256xf32, #tpu.memory_space<vmem>>, vector<16x256xf32>,
    return
  }
  func.func @transform_0(%arg0: i32) -> (i32, i32) {
    %c0_i32 = arith.constant 0 : i32
    %c0_i32_0 = arith.constant 0 : i32
    return %arg0, %c0_i32 : i32, i32
  }
  func.func @transform_1(%arg0: i32) -> (i32, i32) {
    %c0_i32 = arith.constant 0 : i32
    %c0_i32_0 = arith.constant 0 : i32
    return %arg0, %c0_i32 : i32, i32
  }
  func.func @transform_2(%arg0: i32) -> (i32, i32) {
    %c0_i32 = arith.constant 0 : i32
    %c0_i32_0 = arith.constant 0 : i32
    return %arg0, %c0_i32 : i32, i32
  }
  func.func @transform_3(%arg0: i32) -> (i32, i32) {
    %c0_i32 = arith.constant 0 : i32
    %c0_i32_0 = arith.constant 0 : i32
    return %arg0, %c0_i32 : i32, i32
  }
}

</mosaic_0001>

<llo_original>
// kernel: reconst_loss_forward.1
$region0: #{reconst_loss_forward.1}
  #allocation0 [shape = 'u32[]', space=smem, size = 0x4, offset = 0x4, fixed_abs, tag = 'smem constant byte address 0x4 - core index']
  #allocation1 [shape = 'u32[72,128]{1,0:T(1,128)}', space=vmem, size = 0x9000, scoped, tag = 'internal scratch']
  %s0 = inlined_call_operand.vmem [shape: f32[16,256], index: 0, kind: input, shape index: {}]
  %s1 = inlined_call_operand.vmem [shape: f32[16,256], index: 1, kind: input, shape index: {}]
  %s2 = inlined_call_operand.vmem [shape: f32[16,256], index: 2, kind: output, shape index: {0}]
  %s3 = inlined_call_operand.vmem [shape: f32[16,256], index: 3, kind: output, shape index: {1}]
  %4 = xla_tuple %s2, %s3
  %s5 = sld [smem:[#allocation0]]
  $region26: #{reconst_loss_forward.1} parent=0
    _
  %s7 = ssub.s32 1, %s5
  %s8 = scalar_select 0, %s7, %s5
  // Predicated region
  $region2: #{reconst_loss_forward.1} parent=0 // pred_check
    _
  $region3: #{reconst_loss_forward.1} parent=0 // pred_check_branch
    %10 = sbr.rel (0) target = $region5
  $region4: #{reconst_loss_forward.1} parent=0 // pred_region
    _
  $region5: #{reconst_loss_forward.1} parent=0 // pred_fallthru
    _
  // Predicated region
  $region6: #{reconst_loss_forward.1} parent=0 // pred_check
    _
  $region7: #{reconst_loss_forward.1} parent=0 // pred_check_branch
    %12 = sbr.rel (0) target = $region9
  $region8: #{reconst_loss_forward.1} parent=0 // pred_region
    _
  $region9: #{reconst_loss_forward.1} parent=0 // pred_fallthru
    _
  %v13 = vlaneseq
  %v14 = vand.u32 %v13, 127
  %v15 = vadd.s32 %v14, 128
  %16 = vrot.lane.b32.xlu0 %v14, 127
  %v17 = vpop.permute.xlu0 %16
  %18 = vrot.lane.b32.xlu0 %v15, 127
  %v19 = vpop.permute.xlu0 %18
  %vm20 = vcmp.lt.s32.totalorder %v14, 127
  %v21 = vsel %vm20, %v17, %v19
  %v22 = vsel %vm20, %v19, %v17
  %v23 = vadd.s32 %v14, 1
  %v24 = vadd.s32 %v15, 1
  %v25 = vand.u32 %v23, 255
  %v26 = vand.u32 %v24, 255
  %vm27 = vcmp.eq.s32.totalorder %v21, %v25
  %vm28 = vcmp.eq.s32.totalorder %v22, %v26
  %v29 = vand.u32 %v14, 1
  %v30 = vand.u32 %v15, 1
  %vm31 = vcmp.eq.s32.totalorder %v29, 0
  %vm32 = vcmp.eq.s32.totalorder %v30, 0
  %vm33 = vmxor %vm31, %vm27
  %vm34 = vmxor %vm32, %vm28
  %vm35 = vmxor %vm33, 1
  %vm36 = vmxor %vm34, 1
  %s37 = smul.u32 0, 2
  %s38 = smul.addr %s37, 8
  %s39 = scalar_lea.vmem %s0, %s38
  %v40 = vld [vmem:[%s39] sm:$0xff]
  %v41 = vld [vmem:[%s39 + $0x8] sm:$0xff]
  %v42 = vld [vmem:[%s39 + $0x10] sm:$0xff]
  %v43 = vld [vmem:[%s39 + $0x18] sm:$0xff]
  %s44 = smul.addr %s37, 8
  %s45 = scalar_lea.vmem %s1, %s44
  %v46 = vld [vmem:[%s45] sm:$0xff]
  %v47 = vld [vmem:[%s45 + $0x8] sm:$0xff]
  %v48 = vld [vmem:[%s45 + $0x10] sm:$0xff]
  %v49 = vld [vmem:[%s45 + $0x18] sm:$0xff]
  %v50 = vsub.f32 %v40, %v46
  %v51 = vsub.f32 %v41, %v47
  %v52 = vsub.f32 %v42, %v48
  %v53 = vsub.f32 %v43, %v49
  %v54 = vmul.f32 %v50, %v50
  %v55 = vmul.f32 %v51, %v51
  %v56 = vmul.f32 %v52, %v52
  %v57 = vmul.f32 %v53, %v53
  %58 = vrot.lane.b32.xlu0 %v54, 127
  %v59 = vpop.permute.xlu0 %58
  %60 = vrot.lane.b32.xlu0 %v56, 127
  %v61 = vpop.permute.xlu0 %60
  %62 = vrot.lane.b32.xlu0 %v55, 127
  %v63 = vpop.permute.xlu0 %62
  %64 = vrot.lane.b32.xlu0 %v57, 127
  %v65 = vpop.permute.xlu0 %64
  %v66 = vsel %vm20, %v59, %v63
  %v67 = vsel %vm20, %v61, %v65
  %v68 = vsel %vm20, %v63, %v59
  %v69 = vsel %vm20, %v65, %v61
  %v70 = vadd.f32 %v54, %v66
  %v71 = vadd.f32 %v55, %v68
  %v72 = vadd.f32 %v56, %v67
  %v73 = vadd.f32 %v57, %v69
  %74 = vrot.lane.b32.xlu0 %v40, 127
  %v75 = vpop.permute.xlu0 %74
  %76 = vrot.lane.b32.xlu0 %v42, 127
  %v77 = vpop.permute.xlu0 %76
  %78 = vrot.lane.b32.xlu0 %v41, 127
  %v79 = vpop.permute.xlu0 %78
  %80 = vrot.lane.b32.xlu0 %v43, 127
  %v81 = vpop.permute.xlu0 %80
  %v82 = vsel %vm20, %v75, %v79
  %v83 = vsel %vm20, %v77, %v81
  %v84 = vsel %vm20, %v79, %v75
  %v85 = vsel %vm20, %v81, %v77
  %v86 = vsel %vm27, %v40, %v82
  %v87 = vsel %vm28, %v41, %v84
  %v88 = vsel %vm27, %v42, %v83
  %v89 = vsel %vm28, %v43, %v85
  %vm90 = vcmp.ne.f32.partialorder %v86, 0.0
  %vm91 = vcmp.ne.f32.partialorder %v87, 0.0
  %vm92 = vcmp.ne.f32.partialorder %v88, 0.0
  %vm93 = vcmp.ne.f32.partialorder %v89, 0.0
  %vm94 = vmand %vm35, %vm90
  %vm95 = vmand %vm36, %vm91
  %vm96 = vmand %vm35, %vm92
  %vm97 = vmand %vm36, %vm93
  %v98 = vrsqrt.pop %v70
  %v99 = vmul.f32 %v98, %v70
  %v100 = vmul.f32 %v99, %v98
  %v101 = vmul.f32 0.5, %v100
  %v102 = vsub.f32 1.5, %v101
  %v103 = vmul.f32 %v98, %v102
  %v104 = vmul.f32 %v70, %v103
  %vm105 = vcmp.eq.f32.partialorder %v70, inf
  %v106 = vsel %vm105, %v70, %v104
  %vm107 = vcmp.eq.f32.partialorder %v70, 0.0
  %v108 = vand.u32 %v70, 2147483648
  %v109 = vsel %vm107, %v108, %v106
  %v110 = vrsqrt.pop %v71
  %v111 = vmul.f32 %v110, %v71
  %v112 = vmul.f32 %v111, %v110
  %v113 = vmul.f32 0.5, %v112
  %v114 = vsub.f32 1.5, %v113
  %v115 = vmul.f32 %v110, %v114
  %v116 = vmul.f32 %v71, %v115
  %vm117 = vcmp.eq.f32.partialorder %v71, inf
  %v118 = vsel %vm117, %v71, %v116
  %vm119 = vcmp.eq.f32.partialorder %v71, 0.0
  %v120 = vand.u32 %v71, 2147483648
  %v121 = vsel %vm119, %v120, %v118
  %v122 = vrsqrt.pop %v72
  %v123 = vmul.f32 %v122, %v72
  %v124 = vmul.f32 %v123, %v122
  %v125 = vmul.f32 0.5, %v124
  %v126 = vsub.f32 1.5, %v125
  %v127 = vmul.f32 %v122, %v126
  %v128 = vmul.f32 %v72, %v127
  %vm129 = vcmp.eq.f32.partialorder %v72, inf
  %v130 = vsel %vm129, %v72, %v128
  %vm131 = vcmp.eq.f32.partialorder %v72, 0.0
  %v132 = vand.u32 %v72, 2147483648
  %v133 = vsel %vm131, %v132, %v130
  %v134 = vrsqrt.pop %v73
  %v135 = vmul.f32 %v134, %v73
  %v136 = vmul.f32 %v135, %v134
  %v137 = vmul.f32 0.5, %v136
  %v138 = vsub.f32 1.5, %v137
  %v139 = vmul.f32 %v134, %v138
  %v140 = vmul.f32 %v73, %v139
  %vm141 = vcmp.eq.f32.partialorder %v73, inf
  %v142 = vsel %vm141, %v73, %v140
  %vm143 = vcmp.eq.f32.partialorder %v73, 0.0
  %v144 = vand.u32 %v73, 2147483648
  %v145 = vsel %vm143, %v144, %v142
  %v146 = vsel %vm94, %v109, 0.0
  %v147 = vsel %vm95, %v121, 0.0
  %v148 = vsel %vm96, %v133, 0.0
  %v149 = vsel %vm97, %v145, 0.0
  %v150 = vadd.f32 %v146, 0.0
  %v151 = vadd.f32 %v147, 0.0
  %v152 = vadd.f32 %v148, 0.0
  %v153 = vadd.f32 %v149, 0.0
  %v154 = vsel %vm94, 1.0, 0.0
  %v155 = vsel %vm95, 1.0, 0.0
  %v156 = vsel %vm96, 1.0, 0.0
  %v157 = vsel %vm97, 1.0, 0.0
  %v158 = vadd.f32 %v154, 0.0
  %v159 = vadd.f32 %v155, 0.0
  %v160 = vadd.f32 %v156, 0.0
  %v161 = vadd.f32 %v157, 0.0
  %162 = vst [vmem:[%s2] sm:$0xff] %v150
  %163 = vst [vmem:[%s2 + $0x8] sm:$0xff] %v151
  %164 = vst [vmem:[%s2 + $0x10] sm:$0xff] %v152
  %165 = vst [vmem:[%s2 + $0x18] sm:$0xff] %v153
  %166 = vst [vmem:[%s3] sm:$0xff] %v158
  %167 = vst [vmem:[%s3 + $0x8] sm:$0xff] %v159
  %168 = vst [vmem:[%s3 + $0x10] sm:$0xff] %v160
  %169 = vst [vmem:[%s3 + $0x18] sm:$0xff] %v161
  // Predicated region
  $region10: #{reconst_loss_forward.1} parent=0 // pred_check
    _
  $region11: #{reconst_loss_forward.1} parent=0 // pred_check_branch
    %171 = sbr.rel (0) target = $region13
  $region12: #{reconst_loss_forward.1} parent=0 // pred_region
    _
  $region13: #{reconst_loss_forward.1} parent=0 // pred_fallthru
    _
  // Predicated region
  $region14: #{reconst_loss_forward.1} parent=0 // pred_check
    _
  $region15: #{reconst_loss_forward.1} parent=0 // pred_check_branch
    %173 = sbr.rel (0) target = $region17
  $region16: #{reconst_loss_forward.1} parent=0 // pred_region
    _
  $region17: #{reconst_loss_forward.1} parent=0 // pred_fallthru
    _
  // Predicated region
  $region18: #{reconst_loss_forward.1} parent=0 // pred_check
    _
  $region19: #{reconst_loss_forward.1} parent=0 // pred_check_branch
    %175 = sbr.rel (0) target = $region21
  $region20: #{reconst_loss_forward.1} parent=0 // pred_region
    _
  $region21: #{reconst_loss_forward.1} parent=0 // pred_fallthru
    _
  // Predicated region
  $region22: #{reconst_loss_forward.1} parent=0 // pred_check
    _
  $region23: #{reconst_loss_forward.1} parent=0 // pred_check_branch
    %177 = sbr.rel (0) target = $region25
  $region24: #{reconst_loss_forward.1} parent=0 // pred_region
    _
  $region25: #{reconst_loss_forward.1} parent=0 // pred_fallthru
    _

</llo_original>
